<compile_context>
chip_gen: v5e
topology: v5e:2x2
jax: 0.10.0
libtpu: 0.0.40
codegen_flags: <defaults>
</compile_context>

<pallas_src>
import functools

import jax
import jax.numpy as jnp
from jax.experimental import pallas as pl
from jax.experimental.pallas import tpu as pltpu


def _round_up(a: int, b: int) -> int:
    return (a + b - 1) // b * b


def _physical_vmem_bytes() -> int:
    """Per-TensorCore VMEM capacity; conservative 64 MiB (v7x) fallback."""
    default = 64 * 1024 * 1024
    try:
        info = pltpu.get_tpu_info()
    except Exception:
        return default
    for attr in ("vmem_capacity_bytes", "vmem_bytes", "vmem_size_bytes"):
        val = getattr(info, attr, None)
        if val:
            try:
                return int(val)
            except (TypeError, ValueError):
                pass
    return default


def _select_tiles(Kp, Hp, Np, cd_bytes, out_bytes, budget):
    """Pick (block_m, block_h, weight_resident) fitting `budget` VMEM bytes.

    Working-set estimates count Pallas' default double-buffering (x2) on every
    pipelined input/output plus the f32 intermediates the kernel materializes.
    """
    bm_candidates = (1024, 512, 384, 256, 128, 64, 32, 16, 8)
    bh_candidates = (1024, 768, 512, 384, 256, 128)

    # --- Weight-resident fast path: whole W1/W2 live in VMEM. ---------------
    for bm in bm_candidates:
        ws = (2 * (Kp * Hp + Hp * Np) * cd_bytes      # W1, W2   (x2 buffers)
              + 2 * bm * Kp * cd_bytes                # x tile   (x2 buffers)
              + 2 * bm * Np * out_bytes               # out tile (x2 buffers)
              + bm * Hp * 4 + bm * Hp * cd_bytes      # f32 h + bf16 h temps
              + 2 * 2 * (Hp + Np) * 4)                # biases   (x2 buffers)
        if ws <= budget:
            return bm, None, True

    # --- Hidden-tiled path with an f32 accumulator. --------------------------
    for bm in bm_candidates:
        for bh in bh_candidates:
            bh_c = min(bh, Hp)
            ws = (2 * Kp * bh_c * cd_bytes            # W1 chunk (x2)
                  + 2 * bh_c * Np * cd_bytes          # W2 chunk (x2)
                  + 2 * bm * Kp * cd_bytes            # x tile   (x2)
                  + 2 * bm * Np * out_bytes           # out tile (x2)
                  + bm * Np * 4                       # f32 accumulator
                  + bm * bh_c * 4 + bm * bh_c * cd_bytes  # h temps
                  + 2 * 2 * (bh_c + Np) * 4)          # biases   (x2)
            if ws <= budget:
                return bm, bh_c, False
    return 8, 128, False                               # last-resort tiny tiles


# ---------------------------------------------------------------------------
# Kernels
# ---------------------------------------------------------------------------
def expert_kernel_resident(x_ref, w1_ref, b1_ref, w2_ref, b2_ref, o_ref):
    """Grid = (M tiles,).  Full W1/W2 stay resident in VMEM (constant blocks)."""
    h = jnp.dot(x_ref[...], w1_ref[...], preferred_element_type=jnp.float32)
    h = jnp.maximum(h + b1_ref[...], 0.0)
    out = jnp.dot(h.astype(w2_ref.dtype), w2_ref[...],
                  preferred_element_type=jnp.float32)
    o_ref[...] = (out + b2_ref[...]).astype(o_ref.dtype)


def expert_kernel_tiled(x_ref, w1_ref, b1_ref, w2_ref, b2_ref, o_ref, acc_ref):
    """Grid = (M tiles, H tiles).  H is the reduction axis (last, 'arbitrary').

    Per (i, j) step:
        h_j   = relu(x_i @ W1[:, chunk j] + b1[chunk j])   (f32)
        acc  += h_j(bf16) @ W2[chunk j, :]                  (f32 accumulate)
    Finalize at the last j: out_i = acc + b2.  ReLU distributes over the
    hidden tiling, so this is exact.
    """
    j = pl.program_id(1)

    @pl.when(j == 0)
    def _():
        acc_ref[...] = jnp.zeros_like(acc_ref)

    h = jnp.dot(x_ref[...], w1_ref[...], preferred_element_type=jnp.float32)
    h = jnp.maximum(h + b1_ref[...], 0.0)
    acc_ref[...] += jnp.dot(h.astype(w2_ref.dtype), w2_ref[...],
                            preferred_element_type=jnp.float32)

    @pl.when(j == pl.num_programs(1) - 1)
    def _():
        o_ref[...] = (acc_ref[...] + b2_ref[...]).astype(o_ref.dtype)


# ---------------------------------------------------------------------------
# Forward (weights already padded/cast; static config baked in at trace time)
# ---------------------------------------------------------------------------
@functools.partial(
    jax.jit,
    static_argnames=("n_output", "bm", "bh", "resident",
                     "vmem_limit_bytes", "compute_dtype"))
def _expert_forward_padded(x, w1p, b1p, w2p, b2p, *, n_output, bm, bh,
                           resident, vmem_limit_bytes, compute_dtype):
    B, n_input = x.shape
    Kp, Hp = w1p.shape
    Np = w2p.shape[1]
    out_dtype = x.dtype
    cd = jnp.dtype(compute_dtype)
    cd_bytes = cd.itemsize
    out_bytes = jnp.dtype(out_dtype).itemsize

    # Clamp block_m to the (8-rounded) batch; pad rows to a multiple of it.
    bm_eff = min(bm, _round_up(B, 8))
    Mp = _round_up(B, bm_eff)

    # Pad / cast the activation only when needed (zero padding is exact).
    if (Mp, Kp) == (B, n_input):
        xp = x.astype(cd)
    else:
        xp = jnp.zeros((Mp, Kp), cd).at[:B, :n_input].set(x.astype(cd))

    num_m = Mp // bm_eff
    weight_reads = 1 if resident else num_m
    cost = pl.CostEstimate(
        flops=2 * Mp * Kp * Hp + 2 * Mp * Hp * Np,
        transcendentals=0,
        bytes_accessed=(Mp * Kp * cd_bytes
                        + weight_reads * (Kp * Hp + Hp * Np) * cd_bytes
                        + weight_reads * (Hp + Np) * 4
                        + Mp * Np * out_bytes),
    )

    if resident:
        out_padded = pl.pallas_call(
            expert_kernel_resident,
            out_shape=jax.ShapeDtypeStruct((Mp, Np), out_dtype),
            grid_spec=pltpu.PrefetchScalarGridSpec(
                num_scalar_prefetch=0,
                grid=(num_m,),
                in_specs=[
                    pl.BlockSpec((bm_eff, Kp), lambda i: (i, 0)),   # x tile
                    pl.BlockSpec((Kp, Hp), lambda i: (0, 0)),       # W1 (resident)
                    pl.BlockSpec((1, Hp), lambda i: (0, 0)),        # b1
                    pl.BlockSpec((Hp, Np), lambda i: (0, 0)),       # W2 (resident)
                    pl.BlockSpec((1, Np), lambda i: (0, 0)),        # b2
                ],
                out_specs=pl.BlockSpec((bm_eff, Np), lambda i: (i, 0)),
            ),
            compiler_params=pltpu.CompilerParams(
                dimension_semantics=("parallel",),
                vmem_limit_bytes=vmem_limit_bytes,
            ),
            cost_estimate=cost,
        )(xp, w1p, b1p, w2p, b2p)
    else:
        grid = (num_m, Hp // bh)
        out_padded = pl.pallas_call(
            expert_kernel_tiled,
            out_shape=jax.ShapeDtypeStruct((Mp, Np), out_dtype),
            grid_spec=pltpu.PrefetchScalarGridSpec(
                num_scalar_prefetch=0,
                grid=grid,
                in_specs=[
                    pl.BlockSpec((bm_eff, Kp), lambda i, j: (i, 0)),  # x tile
                    pl.BlockSpec((Kp, bh), lambda i, j: (0, j)),      # W1 chunk
                    pl.BlockSpec((1, bh), lambda i, j: (0, j)),       # b1 chunk
                    pl.BlockSpec((bh, Np), lambda i, j: (j, 0)),      # W2 chunk
                    pl.BlockSpec((1, Np), lambda i, j: (0, 0)),       # b2
                ],
                out_specs=pl.BlockSpec((bm_eff, Np), lambda i, j: (i, 0)),
                scratch_shapes=[pltpu.VMEM((bm_eff, Np), jnp.float32)],
            ),
            compiler_params=pltpu.CompilerParams(
                dimension_semantics=("parallel", "arbitrary"),
                vmem_limit_bytes=vmem_limit_bytes,
            ),
            cost_estimate=cost,
        )(xp, w1p, b1p, w2p, b2p)

    if (Mp, Np) == (B, n_output):
        return out_padded
    return out_padded[:B, :n_output]


# ---------------------------------------------------------------------------
# Module wrapper: weights padded/cast once; config chosen per TPU generation.
# ---------------------------------------------------------------------------
class PallasExpert:
    """Pallas TPU equivalent of Expert = Linear -> ReLU -> Linear.

    Weights are stored pre-transposed as (in_features, out_features), i.e. the
    transpose of PyTorch's nn.Linear weight, so y = relu(x @ W1 + b1) @ W2 + b2.
    Padding/casting of the weights happens once here, not per forward call.
    """

    def __init__(self, w1, b1, w2, b2, *, compute_dtype=jnp.bfloat16,
                 block_m=None, block_h=None, weight_resident=None):
        self.n_input, self.n_hidden = w1.shape
        self.n_output = w2.shape[1]
        self.compute_dtype = jnp.dtype(compute_dtype)

        Kp = _round_up(self.n_input, 128)
        Hp = _round_up(self.n_hidden, 128)
        Np = _round_up(self.n_output, 128)

        physical = _physical_vmem_bytes()
        # ~102 MiB scoped limit on v5e/v6e (128 MiB physical), ~51 MiB on v7x.
        self.vmem_limit_bytes = min(int(physical * 0.8), 110 * 1024 * 1024)
        budget = int(self.vmem_limit_bytes * 0.85)

        bm, bh, resident = _select_tiles(
            Kp, Hp, Np, self.compute_dtype.itemsize, 4, budget)

        # Optional explicit overrides (used for testing / tuning).
        if weight_resident is not None:
            resident = bool(weight_resident)
        if block_m is not None:
            bm = _round_up(int(block_m), 8)
        if resident:
            bh = None
        else:
            if block_h is not None:
                bh = _round_up(int(block_h), 128)
            if bh is None:
                bh = min(512, Hp)
            Hp = _round_up(Hp, bh)

        self.bm, self.bh, self.resident = bm, bh, resident

        cd = self.compute_dtype
        self.w1p = jnp.zeros((Kp, Hp), cd).at[
            :self.n_input, :self.n_hidden].set(jnp.asarray(w1, cd))
        self.b1p = jnp.zeros((1, Hp), jnp.float32).at[
            0, :self.n_hidden].set(jnp.asarray(b1, jnp.float32))
        self.w2p = jnp.zeros((Hp, Np), cd).at[
            :self.n_hidden, :self.n_output].set(jnp.asarray(w2, cd))
        self.b2p = jnp.zeros((1, Np), jnp.float32).at[
            0, :self.n_output].set(jnp.asarray(b2, jnp.float32))

    def __call__(self, x):
        return _expert_forward_padded(
            x, self.w1p, self.b1p, self.w2p, self.b2p,
            n_output=self.n_output, bm=self.bm, bh=self.bh,
            resident=self.resident, vmem_limit_bytes=self.vmem_limit_bytes,
            compute_dtype=self.compute_dtype)


def init_expert_params(key, n_input, n_hidden, n_output, dtype=jnp.float32):
    """Deterministic init mimicking PyTorch nn.Linear default U(-1/sqrt(fan_in), +)."""
    k1, k2, k3, k4 = jax.random.split(key, 4)
    bound1 = 1.0 / (n_input ** 0.5)
    bound2 = 1.0 / (n_hidden ** 0.5)
    # Stored as (in, out) = transpose of PyTorch's (out, in) weight.
    w1 = jax.random.uniform(k1, (n_input, n_hidden), dtype, -bound1, bound1)
    b1 = jax.random.uniform(k2, (n_hidden,), dtype, -bound1, bound1)
    w2 = jax.random.uniform(k3, (n_hidden, n_output), dtype, -bound2, bound2)
    b2 = jax.random.uniform(k4, (n_output,), dtype, -bound2, bound2)
    return w1, b1, w2, b2


if __name__ == "__main__":
    key = jax.random.PRNGKey(0)
    kx, kp = jax.random.split(key)

    batch, n_input, n_hidden, n_output = 8, 32, 64, 16
    x = jax.random.normal(kx, (batch, n_input), jnp.float32)
    w1, b1, w2, b2 = init_expert_params(kp, n_input, n_hidden, n_output)

    # Reference with the same bf16 operand rounding as the kernel (f32 accum).
    f32, bf16 = jnp.float32, jnp.bfloat16
    xb = x.astype(bf16).astype(f32)
    w1b = w1.astype(bf16).astype(f32)
    w2b = w2.astype(bf16).astype(f32)
    h_ref = jnp.maximum(xb @ w1b + b1, 0.0).astype(bf16).astype(f32)
    ref = h_ref @ w2b + b2

    # 1) Auto-selected config (weight-resident fast path at these sizes).
    expert = PallasExpert(w1, b1, w2, b2)
    out = expert(x)
    jax.block_until_ready(out)
    assert out.shape == (batch, n_output)
    assert jnp.allclose(out, ref, atol=2e-2, rtol=2e-2), (
        float(jnp.max(jnp.abs(out - ref))))

    # 2) Force the hidden-tiled accumulator path to keep it tested too.
    expert_tiled = PallasExpert(w1, b1, w2, b2, block_m=8, block_h=128,
                                weight_resident=False)
    out2 = expert_tiled(x)
    jax.block_until_ready(out2)
    assert out2.shape == (batch, n_output)
    assert jnp.allclose(out2, ref, atol=2e-2, rtol=2e-2), (
        float(jnp.max(jnp.abs(out2 - ref))))

    print("KERNEL_OK")
</pallas_src>

<mosaic_0001>
module attributes {stable_mosaic.version = 11 : i64} {
  func.func @expert_kernel_resident(%arg0: i32, %arg1: memref<8x128xbf16, #tpu.memory_space<vmem>>, %arg2: memref<128x128xbf16, #tpu.memory_space<vmem>>, %arg3: memref<1x128xf32, #tpu.memory_space<vmem>>, %arg4: memref<128x128xbf16, #tpu.memory_space<vmem>>, %arg5: memref<1x128xf32, #tpu.memory_space<vmem>>, %arg6: memref<8x128xf32, #tpu.memory_space<vmem>>) attributes {dimension_semantics = [#tpu.dimension_semantics<parallel>], iteration_bounds = array<i64: 1>, scalar_prefetch = 0 : i64, scratch_operands = 0 : i64, tpu.core_type = #tpu.core_type<tc>, window_params = [{transform_indices = @transform_0, window_bounds = array<i64: 8, 128>}, {pipeline_mode = #tpu.pipeline_mode<synchronous>, transform_indices = @transform_1, window_bounds = array<i64: 128, 128>}, {pipeline_mode = #tpu.pipeline_mode<synchronous>, transform_indices = @transform_2, window_bounds = array<i64: 1, 128>}, {pipeline_mode = #tpu.pipeline_mode<synchronous>, transform_indices = @transform_3, window_bounds = array<i64: 128, 128>}, {pipeline_mode = #tpu.pipeline_mode<synchronous>, transform_indices = @transform_4, window_bounds = array<i64: 1, 128>}, {transform_indices = @transform_5, window_bounds = array<i64: 8, 128>}]} {
    %c0 = arith.constant 0 : index
    %c0_0 = arith.constant 0 : index
    %0 = vector.load %arg1[%c0, %c0_0] : memref<8x128xbf16, #tpu.memory_space<vmem>>, vector<8x128xbf16>
    %c0_1 = arith.constant 0 : index
    %c0_2 = arith.constant 0 : index
    %1 = vector.load %arg2[%c0_1, %c0_2] : memref<128x128xbf16, #tpu.memory_space<vmem>>, vector<128x128xbf16>
    %cst = arith.constant dense<0.000000e+00> : vector<8x128xf32>
    %2 = tpu.matmul %0, %1, %cst {dimension_numbers = #tpu.dot_dimension_numbers<[1], [0], [0], [1], [0, 0, 1, 1], [], []>} : vector<8x128xbf16>, vector<128x128xbf16>, vector<8x128xf32> -> vector<8x128xf32>
    %c0_3 = arith.constant 0 : index
    %c0_4 = arith.constant 0 : index
    %3 = vector.load %arg3[%c0_3, %c0_4] : memref<1x128xf32, #tpu.memory_space<vmem>>, vector<1x128xf32>
    %4 = vector.broadcast %3 : vector<1x128xf32> to vector<8x128xf32>
    %5 = arith.addf %2, %4 : vector<8x128xf32>
    %cst_5 = arith.constant 0.000000e+00 : f32
    %6 = vector.broadcast %cst_5 : f32 to vector<8x128xf32>
    %7 = arith.maximumf %5, %6 : vector<8x128xf32>
    %8 = arith.truncf %7 : vector<8x128xf32> to vector<8x128xbf16>
    %c0_6 = arith.constant 0 : index
    %c0_7 = arith.constant 0 : index
    %9 = vector.load %arg4[%c0_6, %c0_7] : memref<128x128xbf16, #tpu.memory_space<vmem>>, vector<128x128xbf16>
    %cst_8 = arith.constant dense<0.000000e+00> : vector<8x128xf32>
    %10 = tpu.matmul %8, %9, %cst_8 {dimension_numbers = #tpu.dot_dimension_numbers<[1], [0], [0], [1], [0, 0, 1, 1], [], []>} : vector<8x128xbf16>, vector<128x128xbf16>, vector<8x128xf32> -> vector<8x128xf32>
    %c0_9 = arith.constant 0 : index
    %c0_10 = arith.constant 0 : index
    %11 = vector.load %arg5[%c0_9, %c0_10] : memref<1x128xf32, #tpu.memory_space<vmem>>, vector<1x128xf32>
    %12 = vector.broadcast %11 : vector<1x128xf32> to vector<8x128xf32>
    %13 = arith.addf %10, %12 : vector<8x128xf32>
    %c0_11 = arith.constant 0 : index
    %c0_12 = arith.constant 0 : index
    %14 = vector.load %arg6[%c0_11, %c0_12] : memref<8x128xf32, #tpu.memory_space<vmem>>, vector<8x128xf32>
    tpu.vector_store %arg6[%c0_11, %c0_12], %13 {strides = array<i32>} : memref<8x128xf32, #tpu.memory_space<vmem>>, vector<8x128xf32>,
    return
  }
  func.func @transform_0(%arg0: i32) -> (i32, i32) {
    %c0_i32 = arith.constant 0 : i32
    %c0_i32_0 = arith.constant 0 : i32
    return %arg0, %c0_i32 : i32, i32
  }
  func.func @transform_1(%arg0: i32) -> (i32, i32) {
    %c0_i32 = arith.constant 0 : i32
    %c0_i32_0 = arith.constant 0 : i32
    %c0_i32_1 = arith.constant 0 : i32
    return %c0_i32, %c0_i32_0 : i32, i32
  }
  func.func @transform_2(%arg0: i32) -> (i32, i32) {
    %c0_i32 = arith.constant 0 : i32
    %c0_i32_0 = arith.constant 0 : i32
    %c0_i32_1 = arith.constant 0 : i32
    return %c0_i32, %c0_i32_0 : i32, i32
  }
  func.func @transform_3(%arg0: i32) -> (i32, i32) {
    %c0_i32 = arith.constant 0 : i32
    %c0_i32_0 = arith.constant 0 : i32
    %c0_i32_1 = arith.constant 0 : i32
    return %c0_i32, %c0_i32_0 : i32, i32
  }
  func.func @transform_4(%arg0: i32) -> (i32, i32) {
    %c0_i32 = arith.constant 0 : i32
    %c0_i32_0 = arith.constant 0 : i32
    %c0_i32_1 = arith.constant 0 : i32
    return %c0_i32, %c0_i32_0 : i32, i32
  }
  func.func @transform_5(%arg0: i32) -> (i32, i32) {
    %c0_i32 = arith.constant 0 : i32
    %c0_i32_0 = arith.constant 0 : i32
    return %arg0, %c0_i32 : i32, i32
  }
}

</mosaic_0001>

<llo_original>
// kernel: _expert_forward_padded.1
$region0: #{_expert_forward_padded.1}
  #allocation0 [shape = 'u32[]', space=smem, size = 0x4, offset = 0x4, fixed_abs, tag = 'smem constant byte address 0x4 - core index']
  #allocation1 [shape = 'u32[72,128]{1,0:T(1,128)}', space=vmem, size = 0x9000, scoped, tag = 'internal scratch']
  %s0 = inlined_call_operand.vmem [shape: bf16[8,128], index: 0, kind: input, shape index: {}]
  %s1 = inlined_call_operand.hbm [shape: bf16[128,128], index: 1, kind: input, shape index: {}]
  %s2 = inlined_call_operand.vmem [shape: f32[1,128], index: 2, kind: input, shape index: {}]
  %s3 = inlined_call_operand.hbm [shape: bf16[128,128], index: 3, kind: input, shape index: {}]
  %s4 = inlined_call_operand.vmem [shape: f32[1,128], index: 4, kind: input, shape index: {}]
  %s5 = inlined_call_operand.hbm [shape: f32[8,128], index: 5, kind: output, shape index: {}]
  %s6 = sld [smem:[#allocation0]]
  $region38: #{_expert_forward_padded.1} parent=0
    _
  %s8 = ssub.s32 1, %s6
  %s9 = scalar_select 0, %s8, %s6
  $region1: #{_expert_forward_padded.1} parent=0
    #allocation2 [shape = 'u8[32768]{0}', space=vmem, size = 0x8000, scoped, tag = 'input window, operand 1, single buffered']
    #allocation3 [shape = 's32[1]{0}', space=sflag, size = 0x4, scoped, tag = 'scoped memory for _expert_forward_padded.1']
    #allocation4 [shape = 's32[1]{0}', space=sflag, size = 0x4, scoped, tag = 'scoped memory for _expert_forward_padded.1']
    #allocation5 [shape = 'u8[32768]{0}', space=vmem, size = 0x8000, scoped, tag = 'input window, operand 3, single buffered']
    #allocation6 [shape = 's32[1]{0}', space=sflag, size = 0x4, scoped, tag = 'scoped memory for _expert_forward_padded.1']
    #allocation7 [shape = 'u8[4096]{0}', space=vmem, size = 0x1000, scoped, tag = 'output window, operand 0, single buffered']
    %10 = vsyncpa [#allocation3], 0
    %11 = vsyncpa [#allocation6], 0
    %12 = vsyncpa [#allocation4], 0
    // Predicated region
    $region2: #{_expert_forward_padded.1} parent=1 // pred_check
      _
    $region3: #{_expert_forward_padded.1} parent=1 // pred_check_branch
      %14 = sbr.rel (0) target = $region5
    $region4: #{_expert_forward_padded.1} parent=1 // pred_region
      _
    $region5: #{_expert_forward_padded.1} parent=1 // pred_fallthru
      _
    // Predicated region
    $region6: #{_expert_forward_padded.1} parent=1 // pred_check
      _
    $region7: #{_expert_forward_padded.1} parent=1 // pred_check_branch
      %16 = sbr.rel (0) target = $region9
    $region8: #{_expert_forward_padded.1} parent=1 // pred_region
      %18 = vsyncadd [#allocation3], 0
      %s19 = sshll.u32 %s1, 4
      %s20 = int_to_ptr.hbm [resolvable:$true] %s19
      %s21 = sshll.u32 [#allocation2], 4
      %s22 = int_to_ptr.vmem [resolvable:$true] %s21
      %27 = dma.hbm_to_vmem [thread:$0]  %s20, 1024, %s22, [#allocation3], 64, 64, 4
    $region9: #{_expert_forward_padded.1} parent=1 // pred_fallthru
      _
    // Predicated region
    $region10: #{_expert_forward_padded.1} parent=1 // pred_check
      _
    $region11: #{_expert_forward_padded.1} parent=1 // pred_check_branch
      %29 = sbr.rel (0) target = $region13
    $region12: #{_expert_forward_padded.1} parent=1 // pred_region
      _
    $region13: #{_expert_forward_padded.1} parent=1 // pred_fallthru
      _
    // Predicated region
    $region14: #{_expert_forward_padded.1} parent=1 // pred_check
      _
    $region15: #{_expert_forward_padded.1} parent=1 // pred_check_branch
      %31 = sbr.rel (0) target = $region17
    $region16: #{_expert_forward_padded.1} parent=1 // pred_region
      %33 = vsyncadd [#allocation6], 0
      %s34 = sshll.u32 %s3, 4
      %s35 = int_to_ptr.hbm [resolvable:$true] %s34
      %s36 = sshll.u32 [#allocation5], 4
      %s37 = int_to_ptr.vmem [resolvable:$true] %s36
      %42 = dma.hbm_to_vmem [thread:$0]  %s35, 1024, %s37, [#allocation6], 64, 64, 4
    $region17: #{_expert_forward_padded.1} parent=1 // pred_fallthru
      _
    // Predicated region
    $region18: #{_expert_forward_padded.1} parent=1 // pred_check
      _
    $region19: #{_expert_forward_padded.1} parent=1 // pred_check_branch
      %44 = sbr.rel (0) target = $region21
    $region20: #{_expert_forward_padded.1} parent=1 // pred_region
      _
    $region21: #{_expert_forward_padded.1} parent=1 // pred_fallthru
      _
    // Predicated region
    $region22: #{_expert_forward_padded.1} parent=1 // pred_check
      _
    $region23: #{_expert_forward_padded.1} parent=1 // pred_check_branch
      %46 = sbr.rel (0) target = $region25
    $region24: #{_expert_forward_padded.1} parent=1 // pred_region
      %48 = dma.done [#allocation3], 1024
    $region25: #{_expert_forward_padded.1} parent=1 // pred_fallthru
      _
    // Predicated region
    $region26: #{_expert_forward_padded.1} parent=1 // pred_check
      _
    $region27: #{_expert_forward_padded.1} parent=1 // pred_check_branch
      %50 = sbr.rel (0) target = $region29
    $region28: #{_expert_forward_padded.1} parent=1 // pred_region
      %52 = dma.done [#allocation6], 1024
    $region29: #{_expert_forward_padded.1} parent=1 // pred_fallthru
      _
    %v53 = vld [vmem:[%s0] sm:$0xf]
    %v54 = vld [vmem:[#allocation2] sm:$0xf]
    %v55 = vld [vmem:[#allocation2 + $0x4] sm:$0xf]
    %v56 = vld [vmem:[#allocation2 + $0x8] sm:$0xf]
    %v57 = vld [vmem:[#allocation2 + $0xc] sm:$0xf]
    %v58 = vld [vmem:[#allocation2 + $0x10] sm:$0xf]
    %v59 = vld [vmem:[#allocation2 + $0x14] sm:$0xf]
    %v60 = vld [vmem:[#allocation2 + $0x18] sm:$0xf]
    %v61 = vld [vmem:[#allocation2 + $0x1c] sm:$0xf]
    %v62 = vld [vmem:[#allocation2 + $0x20] sm:$0xf]
    %v63 = vld [vmem:[#allocation2 + $0x24] sm:$0xf]
    %v64 = vld [vmem:[#allocation2 + $0x28] sm:$0xf]
    %v65 = vld [vmem:[#allocation2 + $0x2c] sm:$0xf]
    %v66 = vld [vmem:[#allocation2 + $0x30] sm:$0xf]
    %v67 = vld [vmem:[#allocation2 + $0x34] sm:$0xf]
    %v68 = vld [vmem:[#allocation2 + $0x38] sm:$0xf]
    %v69 = vld [vmem:[#allocation2 + $0x3c] sm:$0xf]
    %v70 = vld [vmem:[%s2] sm:$0x1]
    %v72 = vperm.slane %v70, 0
    %v90 = vunpack.c.l.b16 %v54
    %v91 = vunpack.c.l.b16 %v55
    %v92 = vunpack.c.l.b16 %v56
    %v93 = vunpack.c.l.b16 %v57
    %v94 = vunpack.c.l.b16 %v58
    %v95 = vunpack.c.l.b16 %v59
    %v96 = vunpack.c.l.b16 %v60
    %v97 = vunpack.c.l.b16 %v61
    %v98 = vunpack.c.l.b16 %v62
    %v99 = vunpack.c.l.b16 %v63
    %v100 = vunpack.c.l.b16 %v64
    %v101 = vunpack.c.l.b16 %v65
    %v102 = vunpack.c.l.b16 %v66
    %v103 = vunpack.c.l.b16 %v67
    %v104 = vunpack.c.l.b16 %v68
    %v105 = vunpack.c.l.b16 %v69
    %v106 = vpack.c.b16 %v91, %v90
    %v107 = vpack.c.b16 %v93, %v92
    %v108 = vpack.c.b16 %v95, %v94
    %v109 = vpack.c.b16 %v97, %v96
    %v110 = vpack.c.b16 %v99, %v98
    %v111 = vpack.c.b16 %v101, %v100
    %v112 = vpack.c.b16 %v103, %v102
    %v113 = vpack.c.b16 %v105, %v104
    %122 = vmatpush.bf16.msra.mxu0 %v113
    %123 = vmatpush.bf16.msra.mxu0 %v112
    %124 = vmatpush.bf16.msra.mxu0 %v111
    %125 = vmatpush.bf16.msra.mxu0 %v110
    %126 = vmatpush.bf16.msra.mxu0 %v109
    %127 = vmatpush.bf16.msra.mxu0 %v108
    %128 = vmatpush.bf16.msra.mxu0 %v107
    %129 = vmatpush.bf16.msra.mxu0 %v106
    %130 = vmatmul.bf16.gmra.mxu0 %v53
    %v131 = vpop.f32.mrf.mxu0
    %v132 = vadd.f32 %v72, %v131
    %v133 = vpop.f32.mrf.mxu0
    %134 = vdwg.mxu0
    %v135 = vmax.f32 %v132, 0.0
    %v136 = vpack.c.bf16 %v135, %v135
    %v137 = vld [vmem:[#allocation5] sm:$0xf]
    %v138 = vld [vmem:[#allocation5 + $0x4] sm:$0xf]
    %v139 = vld [vmem:[#allocation5 + $0x8] sm:$0xf]
    %v140 = vld [vmem:[#allocation5 + $0xc] sm:$0xf]
    %v141 = vld [vmem:[#allocation5 + $0x10] sm:$0xf]
    %v142 = vld [vmem:[#allocation5 + $0x14] sm:$0xf]
    %v143 = vld [vmem:[#allocation5 + $0x18] sm:$0xf]
    %v144 = vld [vmem:[#allocation5 + $0x1c] sm:$0xf]
    %v145 = vld [vmem:[#allocation5 + $0x20] sm:$0xf]
    %v146 = vld [vmem:[#allocation5 + $0x24] sm:$0xf]
    %v147 = vld [vmem:[#allocation5 + $0x28] sm:$0xf]
    %v148 = vld [vmem:[#allocation5 + $0x2c] sm:$0xf]
    %v149 = vld [vmem:[#allocation5 + $0x30] sm:$0xf]
    %v150 = vld [vmem:[#allocation5 + $0x34] sm:$0xf]
    %v151 = vld [vmem:[#allocation5 + $0x38] sm:$0xf]
    %v152 = vld [vmem:[#allocation5 + $0x3c] sm:$0xf]
    %v153 = vld [vmem:[%s4] sm:$0x1]
    %v155 = vperm.slane %v153, 0
    %v173 = vunpack.c.l.b16 %v137
    %v174 = vunpack.c.l.b16 %v138
    %v175 = vunpack.c.l.b16 %v139
    %v176 = vunpack.c.l.b16 %v140
    %v177 = vunpack.c.l.b16 %v141
    %v178 = vunpack.c.l.b16 %v142
    %v179 = vunpack.c.l.b16 %v143
    %v180 = vunpack.c.l.b16 %v144
    %v181 = vunpack.c.l.b16 %v145
    %v182 = vunpack.c.l.b16 %v146
    %v183 = vunpack.c.l.b16 %v147
    %v184 = vunpack.c.l.b16 %v148
    %v185 = vunpack.c.l.b16 %v149
    %v186 = vunpack.c.l.b16 %v150
    %v187 = vunpack.c.l.b16 %v151
    %v188 = vunpack.c.l.b16 %v152
    %v189 = vpack.c.b16 %v174, %v173
    %v190 = vpack.c.b16 %v176, %v175
    %v191 = vpack.c.b16 %v178, %v177
    %v192 = vpack.c.b16 %v180, %v179
    %v193 = vpack.c.b16 %v182, %v181
    %v194 = vpack.c.b16 %v184, %v183
    %v195 = vpack.c.b16 %v186, %v185
    %v196 = vpack.c.b16 %v188, %v187
    %205 = vmatpush.bf16.msra.mxu0 %v196
    %206 = vmatpush.bf16.msra.mxu0 %v195
    %207 = vmatpush.bf16.msra.mxu0 %v194
    %208 = vmatpush.bf16.msra.mxu0 %v193
    %209 = vmatpush.bf16.msra.mxu0 %v192
    %210 = vmatpush.bf16.msra.mxu0 %v191
    %211 = vmatpush.bf16.msra.mxu0 %v190
    %212 = vmatpush.bf16.msra.mxu0 %v189
    %213 = vmatmul.bf16.gmra.mxu0 %v136
    %v214 = vpop.f32.mrf.mxu0
    %v215 = vadd.f32 %v155, %v214
    %v216 = vpop.f32.mrf.mxu0
    %217 = vdwg.mxu0
    %218 = vst [vmem:[#allocation7] sm:$0xff] %v215
    // Predicated region
    $region30: #{_expert_forward_padded.1} parent=1 // pred_check
      _
    $region31: #{_expert_forward_padded.1} parent=1 // pred_check_branch
      %220 = sbr.rel (0) target = $region33
    $region32: #{_expert_forward_padded.1} parent=1 // pred_region
      %222 = vsyncadd [#allocation4], 0
      %s224 = sshll.u32 [#allocation7], 4
      %s225 = int_to_ptr.vmem [resolvable:$true] %s224
      %s226 = sshll.u32 %s5, 4
      %s227 = int_to_ptr.hbm [resolvable:$true] %s226
      %229 = dma.vmem_to_hbm [thread:$0]  %s225, 128, %s227, [#allocation4]
    $region33: #{_expert_forward_padded.1} parent=1 // pred_fallthru
      _
    // Predicated region
    $region34: #{_expert_forward_padded.1} parent=1 // pred_check
      _
    $region35: #{_expert_forward_padded.1} parent=1 // pred_check_branch
      %231 = sbr.rel (0) target = $region37
    $region36: #{_expert_forward_padded.1} parent=1 // pred_region
      %233 = dma.done [#allocation4], 128
    $region37: #{_expert_forward_padded.1} parent=1 // pred_fallthru
      _
    %234 = vsyncpa [#allocation3], 1
    %235 = vsyncpa [#allocation6], 1
    %236 = vsyncpa [#allocation4], 1

</llo_original>
